<compile_context>
chip_gen: v6e
topology: v6e:2x2x1
jax: 0.10.0
libtpu: 0.0.40
codegen_flags: <defaults>
</compile_context>

<pallas_src>
import functools
import math

import jax
import jax.numpy as jnp
from jax.experimental import pallas as pl
from jax.experimental.pallas import tpu as pltpu

# ---- Model hyper-params (from the PyTorch module) ---------------------------
EMBEDDING_SIZE = 2
N_HIDDEN = 2
SENTENCES = ['我 喜欢 玩具', '我 爱 爸爸', '我 讨厌 挨打']
WORD_LIST = sorted(set(' '.join(SENTENCES).split()))   # deterministic ordering
VOC_SIZE = len(WORD_LIST)                               # 7
WORD2IDX = {w: i for i, w in enumerate(WORD_LIST)}

# ---- Padded / packed layout constants ---------------------------------------
BP = 8            # batch rows padded to one sublane group
VP = 8            # vocab padded to 8 for the one-hot contraction
LANES = 128       # lane width of the packed parameter slab / output tile

ROW_FUSED = 0                           # [VP, 4H]  : C @ concat(W_ih)  (i|f|o|g)
ROW_B = ROW_FUSED + VP                  # [BP, 4H]  : (b_ih + b_hh), sublane-replicated
ROW_WHH = ROW_B + BP                    # H blocks of [BP, 4H] : W_hh rows, replicated
ROW_WLIN = ROW_WHH + N_HIDDEN * BP      # H blocks of [BP, V]  : W_lin rows, replicated
ROW_BLIN = ROW_WLIN + N_HIDDEN * BP     # [BP, V]   : b_lin, replicated
P_ROWS = ROW_BLIN + BP                  # 56


# ---- Pallas kernel ----------------------------------------------------------
def nplm_kernel(ids_ref, p_ref, out_ref, *, B, T):
    H = N_HIDDEN
    TBP = T * BP

    # Parameter views: static slices of the single packed slab. Row-shaped
    # params were pre-replicated across 8 sublanes at pack time, so no
    # in-kernel sublane broadcasts are needed.
    fused = p_ref[ROW_FUSED:ROW_FUSED + VP, :]                                   # [VP, 128]
    bias = p_ref[ROW_B:ROW_B + BP, :]                                            # [BP, 128]
    whh = [p_ref[ROW_WHH + k * BP:ROW_WHH + (k + 1) * BP, :] for k in range(H)]  # H x [BP, 128]
    wlin = [p_ref[ROW_WLIN + k * BP:ROW_WLIN + (k + 1) * BP, :] for k in range(H)]
    b_lin = p_ref[ROW_BLIN:ROW_BLIN + BP, :]                                     # [BP, 128]

    # Build the [T*BP, VP] one-hot in-kernel from the SMEM scalar-prefetched
    # token ids (padded batch rows keep id = -1 -> all-zero one-hot row).
    row_iota = jax.lax.broadcasted_iota(jnp.int32, (TBP, VP), 0)
    col_iota = jax.lax.broadcasted_iota(jnp.int32, (TBP, VP), 1)
    ids_mat = jnp.full((TBP, VP), -1, jnp.int32)
    for t in range(T):
        for b in range(B):
            r = t * BP + b
            ids_mat = jnp.where(row_iota == r, ids_ref[b * T + t], ids_mat)
    onehot = (col_iota == ids_mat).astype(jnp.float32)                           # [TBP, VP]

    # Single MXU dot: embedding lookup + fused 4-gate input projection for ALL
    # timesteps at once (C @ W_ih was folded at pack time), hoisted off the
    # recurrence's critical path.
    xproj = jnp.dot(onehot, fused, preferred_element_type=jnp.float32)           # [TBP, 128]

    # LSTM recurrence: only the h-dependent contraction stays in the loop,
    # computed as K=H=2 VPU broadcast FMAs (no serial MXU round trips).
    h = jnp.zeros((BP, H), jnp.float32)
    c = jnp.zeros((BP, H), jnp.float32)
    for t in range(T):                                    # small & static -> unrolled
        z = xproj[t * BP:(t + 1) * BP, :] + bias          # [BP, 128], 8-row aligned slice
        if t > 0:                                         # h == 0 at t == 0
            for k in range(H):
                z = z + h[:, k:k + 1] * whh[k]
        # Gate layout (i|f|o|g): one sigmoid covers 3 gates, one tanh the last.
        sig = jax.nn.sigmoid(z[:, 0:3 * H])
        i_g = sig[:, 0:H]
        f_g = sig[:, H:2 * H]
        o_g = sig[:, 2 * H:3 * H]
        g_g = jnp.tanh(z[:, 3 * H:4 * H])
        c = f_g * c + i_g * g_g
        h = o_g * jnp.tanh(c)

    # Output projection as VPU FMAs; full lane-dense [BP, 128] unmasked store.
    out = b_lin + h[:, 0:1] * wlin[0]
    for k in range(1, H):
        out = out + h[:, k:k + 1] * wlin[k]
    out_ref[...] = out


# ---- Host-side packing & wrapper --------------------------------------------
def pack_params(C, W_ih, W_hh, b, W_lin, b_lin):
    """Pack all parameters into one [56, 128] f32 slab.

    Gate order is (i|f|o|g) so the kernel can apply one sigmoid over cols
    0:3H and one tanh over 3H:4H. The embedding table C is folded into the
    input projection (fused = C @ concat(W_ih)). Row-shaped params are
    replicated across 8 sublanes.
    """
    V, E = C.shape
    H = W_hh.shape[-1]
    order = (0, 1, 3, 2)                                              # PyTorch order is (i, f, g, o)
    w_ih_cat = jnp.concatenate([W_ih[k] for k in order], axis=1)      # [E, 4H]
    w_hh_cat = jnp.concatenate([W_hh[k] for k in order], axis=1)      # [H, 4H]
    b_cat = jnp.concatenate([b[k] for k in order], axis=1)            # [1, 4H]
    fused = C @ w_ih_cat                                              # [V, 4H]

    P = jnp.zeros((P_ROWS, LANES), jnp.float32)
    P = P.at[ROW_FUSED:ROW_FUSED + V, 0:4 * H].set(fused)
    P = P.at[ROW_B:ROW_B + BP, 0:4 * H].set(jnp.tile(b_cat, (BP, 1)))
    for k in range(H):
        P = P.at[ROW_WHH + k * BP:ROW_WHH + (k + 1) * BP, 0:4 * H].set(
            jnp.tile(w_hh_cat[k:k + 1], (BP, 1)))
        P = P.at[ROW_WLIN + k * BP:ROW_WLIN + (k + 1) * BP, 0:V].set(
            jnp.tile(W_lin[k:k + 1], (BP, 1)))
    P = P.at[ROW_BLIN:ROW_BLIN + BP, 0:V].set(jnp.tile(b_lin, (BP, 1)))
    return P


def nplm_forward(ids, params_packed):
    B, T = ids.shape
    assert B <= BP and VOC_SIZE <= VP
    ids_flat = ids.reshape(-1).astype(jnp.int32)          # [B*T], row-major (b, t)

    kernel = functools.partial(nplm_kernel, B=B, T=T)
    grid_spec = pltpu.PrefetchScalarGridSpec(
        num_scalar_prefetch=1,
        grid=(1,),
        in_specs=[pl.BlockSpec((P_ROWS, LANES), lambda i, ids: (0, 0))],
        out_specs=pl.BlockSpec((BP, LANES), lambda i, ids: (0, 0)),
    )
    out_full = pl.pallas_call(
        kernel,
        out_shape=jax.ShapeDtypeStruct((BP, LANES), jnp.float32),
        grid_spec=grid_spec,
        compiler_params=pltpu.CompilerParams(dimension_semantics=("arbitrary",)),
    )(ids_flat, params_packed)
    return out_full[:B, :VOC_SIZE]


# ---- Pure-JAX reference (for a correctness sanity check) --------------------
def nplm_reference(ids, C, W_ih, W_hh, b, W_lin, b_lin):
    B, T = ids.shape
    H = W_hh.shape[-1]
    emb = C[ids]                                    # [B, T, E]
    h = jnp.zeros((B, H), jnp.float32)
    c = jnp.zeros((B, H), jnp.float32)
    for t in range(T):
        x_t = emb[:, t, :]
        g = [x_t @ W_ih[k] + h @ W_hh[k] + b[k] for k in range(4)]
        i_g = jax.nn.sigmoid(g[0])
        f_g = jax.nn.sigmoid(g[1])
        g_g = jnp.tanh(g[2])
        o_g = jax.nn.sigmoid(g[3])
        c = f_g * c + i_g * g_g
        h = o_g * jnp.tanh(c)
    return h @ W_lin + b_lin


# ---- Parameter init (deterministic, matching PyTorch shapes) ----------------
def init_params(key):
    V, E, H = VOC_SIZE, EMBEDDING_SIZE, N_HIDDEN
    k_emb, k_ih, k_hh, k_bih, k_bhh, k_lw, k_lb = jax.random.split(key, 7)

    # nn.Embedding: N(0, 1)
    C = jax.random.normal(k_emb, (V, E), jnp.float32)

    # nn.LSTM: U(-1/sqrt(H), 1/sqrt(H)); gate order (i, f, g, o)
    bound = 1.0 / math.sqrt(H)
    W_ih = jax.random.uniform(k_ih, (4, E, H), jnp.float32, -bound, bound)
    W_hh = jax.random.uniform(k_hh, (4, H, H), jnp.float32, -bound, bound)
    b_ih = jax.random.uniform(k_bih, (4, 1, H), jnp.float32, -bound, bound)
    b_hh = jax.random.uniform(k_bhh, (4, 1, H), jnp.float32, -bound, bound)
    b = b_ih + b_hh

    # nn.Linear(H, V): weight (V, H), bias (V,); kernel wants [H, V] and [1, V]
    lbound = 1.0 / math.sqrt(H)
    W_lin = jax.random.uniform(k_lw, (H, V), jnp.float32, -lbound, lbound)
    b_lin = jax.random.uniform(k_lb, (1, V), jnp.float32, -lbound, lbound)

    return C, W_ih, W_hh, b, W_lin, b_lin


if __name__ == "__main__":
    key = jax.random.PRNGKey(0)
    C, W_ih, W_hh, b, W_lin, b_lin = init_params(key)
    params_packed = pack_params(C, W_ih, W_hh, b, W_lin, b_lin)

    # Inputs consistent with the NPLM training setup: first 2 words of each
    # sentence as context -> ids of shape [batch=3, seq=2].
    input_words = [s.split()[:2] for s in SENTENCES]
    ids = jnp.array([[WORD2IDX[w] for w in ws] for ws in input_words],
                    dtype=jnp.int32)                      # [3, 2]

    out = nplm_forward(ids, params_packed)
    out = jax.block_until_ready(out)

    ref = nplm_reference(ids, C, W_ih, W_hh, b, W_lin, b_lin)
    assert out.shape == (len(SENTENCES), VOC_SIZE)
    assert jnp.allclose(out, ref, atol=1e-5, rtol=1e-5), "mismatch vs reference"

    print("KERNEL_OK")
</pallas_src>

<mosaic_0001>
module attributes {stable_mosaic.version = 11 : i64} {
  func.func @nplm_kernel(%arg0: i32, %arg1: memref<6xi32, #tpu.memory_space<smem>>, %arg2: memref<56x128xf32, #tpu.memory_space<vmem>>, %arg3: memref<8x128xf32, #tpu.memory_space<vmem>>) attributes {dimension_semantics = [#tpu.dimension_semantics<arbitrary>], iteration_bounds = array<i64: 1>, scalar_prefetch = 1 : i64, scratch_operands = 0 : i64, tpu.core_type = #tpu.core_type<tc>, window_params = [{pipeline_mode = #tpu.pipeline_mode<synchronous>, transform_indices = @transform_0, window_bounds = array<i64: 56, 128>}, {pipeline_mode = #tpu.pipeline_mode<synchronous>, transform_indices = @transform_1, window_bounds = array<i64: 8, 128>}]} {
    %c0 = arith.constant 0 : index
    %c0_0 = arith.constant 0 : index
    %0 = vector.load %arg2[%c0, %c0_0] : memref<56x128xf32, #tpu.memory_space<vmem>>, vector<8x128xf32>
    %c8 = arith.constant 8 : index
    %c0_1 = arith.constant 0 : index
    %1 = vector.load %arg2[%c8, %c0_1] : memref<56x128xf32, #tpu.memory_space<vmem>>, vector<8x128xf32>
    %c16 = arith.constant 16 : index
    %c0_2 = arith.constant 0 : index
    %2 = vector.load %arg2[%c16, %c0_2] : memref<56x128xf32, #tpu.memory_space<vmem>>, vector<8x128xf32>
    %c24 = arith.constant 24 : index
    %c0_3 = arith.constant 0 : index
    %3 = vector.load %arg2[%c24, %c0_3] : memref<56x128xf32, #tpu.memory_space<vmem>>, vector<8x128xf32>
    %c32 = arith.constant 32 : index
    %c0_4 = arith.constant 0 : index
    %4 = vector.load %arg2[%c32, %c0_4] : memref<56x128xf32, #tpu.memory_space<vmem>>, vector<8x128xf32>
    %c40 = arith.constant 40 : index
    %c0_5 = arith.constant 0 : index
    %5 = vector.load %arg2[%c40, %c0_5] : memref<56x128xf32, #tpu.memory_space<vmem>>, vector<8x128xf32>
    %c48 = arith.constant 48 : index
    %c0_6 = arith.constant 0 : index
    %6 = vector.load %arg2[%c48, %c0_6] : memref<56x128xf32, #tpu.memory_space<vmem>>, vector<8x128xf32>
    %7 = tpu.iota {dimensions = array<i32: 0>} : vector<16x8xi32>
    %8 = tpu.iota {dimensions = array<i32: 1>} : vector<16x8xi32>
    %c-1_i32 = arith.constant -1 : i32
    %9 = vector.broadcast %c-1_i32 : i32 to vector<16x8xi32>
    %c0_i32 = arith.constant 0 : i32
    %10 = vector.broadcast %c0_i32 : i32 to vector<16x8xi32>
    %11 = arith.cmpi eq, %7, %10 : vector<16x8xi32>
    %c0_7 = arith.constant 0 : index
    %12 = memref.load %arg1[%c0_7] : memref<6xi32, #tpu.memory_space<smem>>
    %13 = vector.broadcast %12 : i32 to vector<16x8xi32>
    %14 = arith.select %11, %13, %9 : vector<16x8xi1>, vector<16x8xi32>
    %c1_i32 = arith.constant 1 : i32
    %15 = vector.broadcast %c1_i32 : i32 to vector<16x8xi32>
    %16 = arith.cmpi eq, %7, %15 : vector<16x8xi32>
    %c2 = arith.constant 2 : index
    %17 = memref.load %arg1[%c2] : memref<6xi32, #tpu.memory_space<smem>>
    %18 = vector.broadcast %17 : i32 to vector<16x8xi32>
    %19 = arith.select %16, %18, %14 : vector<16x8xi1>, vector<16x8xi32>
    %c2_i32 = arith.constant 2 : i32
    %20 = vector.broadcast %c2_i32 : i32 to vector<16x8xi32>
    %21 = arith.cmpi eq, %7, %20 : vector<16x8xi32>
    %c4 = arith.constant 4 : index
    %22 = memref.load %arg1[%c4] : memref<6xi32, #tpu.memory_space<smem>>
    %23 = vector.broadcast %22 : i32 to vector<16x8xi32>
    %24 = arith.select %21, %23, %19 : vector<16x8xi1>, vector<16x8xi32>
    %c8_i32 = arith.constant 8 : i32
    %25 = vector.broadcast %c8_i32 : i32 to vector<16x8xi32>
    %26 = arith.cmpi eq, %7, %25 : vector<16x8xi32>
    %c1 = arith.constant 1 : index
    %27 = memref.load %arg1[%c1] : memref<6xi32, #tpu.memory_space<smem>>
    %28 = vector.broadcast %27 : i32 to vector<16x8xi32>
    %29 = arith.select %26, %28, %24 : vector<16x8xi1>, vector<16x8xi32>
    %c9_i32 = arith.constant 9 : i32
    %30 = vector.broadcast %c9_i32 : i32 to vector<16x8xi32>
    %31 = arith.cmpi eq, %7, %30 : vector<16x8xi32>
    %c3 = arith.constant 3 : index
    %32 = memref.load %arg1[%c3] : memref<6xi32, #tpu.memory_space<smem>>
    %33 = vector.broadcast %32 : i32 to vector<16x8xi32>
    %34 = arith.select %31, %33, %29 : vector<16x8xi1>, vector<16x8xi32>
    %c10_i32 = arith.constant 10 : i32
    %35 = vector.broadcast %c10_i32 : i32 to vector<16x8xi32>
    %36 = arith.cmpi eq, %7, %35 : vector<16x8xi32>
    %c5 = arith.constant 5 : index
    %37 = memref.load %arg1[%c5] : memref<6xi32, #tpu.memory_space<smem>>
    %38 = vector.broadcast %37 : i32 to vector<16x8xi32>
    %39 = arith.select %36, %38, %34 : vector<16x8xi1>, vector<16x8xi32>
    %40 = arith.cmpi eq, %8, %39 : vector<16x8xi32>
    %41 = arith.extui %40 : vector<16x8xi1> to vector<16x8xi32>
    %42 = arith.sitofp %41 : vector<16x8xi32> to vector<16x8xf32>
    %cst = arith.constant dense<0.000000e+00> : vector<16x128xf32>
    %43 = tpu.matmul %42, %0, %cst {dimension_numbers = #tpu.dot_dimension_numbers<[1], [0], [0], [1], [0, 0, 1, 1], [], []>} : vector<16x8xf32>, vector<8x128xf32>, vector<16x128xf32> -> vector<16x128xf32>
    %cst_8 = arith.constant 0.000000e+00 : f32
    %44 = vector.broadcast %cst_8 : f32 to vector<8x2xf32>
    %45 = vector.extract_strided_slice %43 {offsets = [0, 0], sizes = [8, 128], strides = [1, 1]} : vector<16x128xf32> to vector<8x128xf32>
    %46 = arith.addf %45, %1 : vector<8x128xf32>
    %47 = vector.extract_strided_slice %46 {offsets = [0, 0], sizes = [8, 6], strides = [1, 1]} : vector<8x128xf32> to vector<8x6xf32>
    %48 = arith.negf %47 : vector<8x6xf32>
    %49 = math.exp %48 : vector<8x6xf32>
    %cst_9 = arith.constant 1.000000e+00 : f32
    %50 = vector.broadcast %cst_9 : f32 to vector<8x6xf32>
    %51 = arith.addf %50, %49 : vector<8x6xf32>
    %52 = arith.divf %50, %51 : vector<8x6xf32>
    %53 = vector.extract_strided_slice %52 {offsets = [0, 0], sizes = [8, 2], strides = [1, 1]} : vector<8x6xf32> to vector<8x2xf32>
    %54 = vector.extract_strided_slice %52 {offsets = [0, 2], sizes = [8, 2], strides = [1, 1]} : vector<8x6xf32> to vector<8x2xf32>
    %55 = vector.extract_strided_slice %52 {offsets = [0, 4], sizes = [8, 2], strides = [1, 1]} : vector<8x6xf32> to vector<8x2xf32>
    %56 = vector.extract_strided_slice %46 {offsets = [0, 6], sizes = [8, 2], strides = [1, 1]} : vector<8x128xf32> to vector<8x2xf32>
    %57 = math.tanh %56 : vector<8x2xf32>
    %58 = arith.mulf %54, %44 : vector<8x2xf32>
    %59 = arith.mulf %53, %57 : vector<8x2xf32>
    %60 = arith.addf %58, %59 : vector<8x2xf32>
    %61 = math.tanh %60 : vector<8x2xf32>
    %62 = arith.mulf %55, %61 : vector<8x2xf32>
    %63 = vector.extract_strided_slice %43 {offsets = [8, 0], sizes = [8, 128], strides = [1, 1]} : vector<16x128xf32> to vector<8x128xf32>
    %64 = arith.addf %63, %1 : vector<8x128xf32>
    %65 = vector.extract_strided_slice %62 {offsets = [0, 0], sizes = [8, 1], strides = [1, 1]} : vector<8x2xf32> to vector<8x1xf32>
    %66 = vector.broadcast %65 : vector<8x1xf32> to vector<8x128xf32>
    %67 = arith.mulf %66, %2 : vector<8x128xf32>
    %68 = arith.addf %64, %67 : vector<8x128xf32>
    %69 = vector.extract_strided_slice %62 {offsets = [0, 1], sizes = [8, 1], strides = [1, 1]} : vector<8x2xf32> to vector<8x1xf32>
    %70 = vector.broadcast %69 : vector<8x1xf32> to vector<8x128xf32>
    %71 = arith.mulf %70, %3 : vector<8x128xf32>
    %72 = arith.addf %68, %71 : vector<8x128xf32>
    %73 = vector.extract_strided_slice %72 {offsets = [0, 0], sizes = [8, 6], strides = [1, 1]} : vector<8x128xf32> to vector<8x6xf32>
    %74 = arith.negf %73 : vector<8x6xf32>
    %75 = math.exp %74 : vector<8x6xf32>
    %cst_10 = arith.constant 1.000000e+00 : f32
    %76 = vector.broadcast %cst_10 : f32 to vector<8x6xf32>
    %77 = arith.addf %76, %75 : vector<8x6xf32>
    %78 = arith.divf %76, %77 : vector<8x6xf32>
    %79 = vector.extract_strided_slice %78 {offsets = [0, 0], sizes = [8, 2], strides = [1, 1]} : vector<8x6xf32> to vector<8x2xf32>
    %80 = vector.extract_strided_slice %78 {offsets = [0, 2], sizes = [8, 2], strides = [1, 1]} : vector<8x6xf32> to vector<8x2xf32>
    %81 = vector.extract_strided_slice %78 {offsets = [0, 4], sizes = [8, 2], strides = [1, 1]} : vector<8x6xf32> to vector<8x2xf32>
    %82 = vector.extract_strided_slice %72 {offsets = [0, 6], sizes = [8, 2], strides = [1, 1]} : vector<8x128xf32> to vector<8x2xf32>
    %83 = math.tanh %82 : vector<8x2xf32>
    %84 = arith.mulf %80, %60 : vector<8x2xf32>
    %85 = arith.mulf %79, %83 : vector<8x2xf32>
    %86 = arith.addf %84, %85 : vector<8x2xf32>
    %87 = math.tanh %86 : vector<8x2xf32>
    %88 = arith.mulf %81, %87 : vector<8x2xf32>
    %89 = vector.extract_strided_slice %88 {offsets = [0, 0], sizes = [8, 1], strides = [1, 1]} : vector<8x2xf32> to vector<8x1xf32>
    %90 = vector.broadcast %89 : vector<8x1xf32> to vector<8x128xf32>
    %91 = arith.mulf %90, %4 : vector<8x128xf32>
    %92 = arith.addf %6, %91 : vector<8x128xf32>
    %93 = vector.extract_strided_slice %88 {offsets = [0, 1], sizes = [8, 1], strides = [1, 1]} : vector<8x2xf32> to vector<8x1xf32>
    %94 = vector.broadcast %93 : vector<8x1xf32> to vector<8x128xf32>
    %95 = arith.mulf %94, %5 : vector<8x128xf32>
    %96 = arith.addf %92, %95 : vector<8x128xf32>
    %c0_11 = arith.constant 0 : index
    %c0_12 = arith.constant 0 : index
    %97 = vector.load %arg3[%c0_11, %c0_12] : memref<8x128xf32, #tpu.memory_space<vmem>>, vector<8x128xf32>
    tpu.vector_store %arg3[%c0_11, %c0_12], %96 {strides = array<i32>} : memref<8x128xf32, #tpu.memory_space<vmem>>, vector<8x128xf32>,
    return
  }
  func.func @transform_0(%arg0: i32, %arg1: memref<6xi32, #tpu.memory_space<smem>>) -> (i32, i32) {
    %c0_i32 = arith.constant 0 : i32
    %c0_i32_0 = arith.constant 0 : i32
    %c0_i32_1 = arith.constant 0 : i32
    return %c0_i32, %c0_i32_0 : i32, i32
  }
  func.func @transform_1(%arg0: i32, %arg1: memref<6xi32, #tpu.memory_space<smem>>) -> (i32, i32) {
    %c0_i32 = arith.constant 0 : i32
    %c0_i32_0 = arith.constant 0 : i32
    %c0_i32_1 = arith.constant 0 : i32
    return %c0_i32, %c0_i32_0 : i32, i32
  }
}

</mosaic_0001>

<llo_original>
// kernel: tpu_custom_call.1
$region0: #{tpu_custom_call.1}
  #allocation0 [shape = 'u32[]', space=smem, size = 0x4, offset = 0x4, fixed_abs, tag = 'smem constant byte address 0x4 - core index']
  #allocation1 [shape = 'u32[144,128]{1,0:T(1,128)}', space=vmem, size = 0x12000, scoped, tag = 'internal scratch']
  #allocation2 [shape = 's32[1]{0}', space=sflag, size = 0x4, scoped, tag = 'scoped memory for tpu_custom_call.1']
  #allocation3 [shape = 'u8[512]{0}', space=smem, size = 0x200, scoped, tag = 'prefetched SMEM operand 0']
  %s0 = inlined_call_operand.hbm [shape: s32[6], index: 0, kind: input, shape index: {}]
  %s1 = inlined_call_operand.hbm [shape: f32[56,128], index: 1, kind: input, shape index: {}]
  %s2 = inlined_call_operand.hbm [shape: f32[8,128], index: 2, kind: output, shape index: {}]
  %s3 = sld [smem:[#allocation0]]
  $region18: #{tpu_custom_call.1} parent=0
    _
  %s5 = ssub.s32 1, %s3
  %s6 = scalar_select 0, %s5, %s3
  %8 = dma.hbm_to_smem %s0, 16, [#allocation3], [#allocation2]
  %9 = dma.done [#allocation2], 16
  %10 = sfence
  $region1: #{tpu_custom_call.1} parent=0
    #allocation4 [shape = 'u8[28672]{0}', space=vmem, size = 0x7000, scoped, tag = 'input window, operand 1, single buffered']
    #allocation5 [shape = 's32[1]{0}', space=sflag, size = 0x4, scoped, tag = 'scoped memory for tpu_custom_call.1']
    #allocation6 [shape = 's32[1]{0}', space=sflag, size = 0x4, scoped, tag = 'scoped memory for tpu_custom_call.1']
    #allocation7 [shape = 'u8[4096]{0}', space=vmem, size = 0x1000, scoped, tag = 'output window, operand 0, single buffered']
    %11 = vsyncpa [#allocation5], 0
    %12 = vsyncpa [#allocation6], 0
    // Predicated region
    $region2: #{tpu_custom_call.1} parent=1 // pred_check
      _
    $region3: #{tpu_custom_call.1} parent=1 // pred_check_branch
      %14 = sbr.rel (0) target = $region5
    $region4: #{tpu_custom_call.1} parent=1 // pred_region
      %s16 = ssub.s32 896, 896
      %17 = vsyncadd [#allocation5], %s16
      %s18 = sshll.u32 [#allocation4], 4
      %s19 = int_to_ptr.vmem [resolvable:$true] %s18
      %24 = dma.hbm_to_vmem [thread:$0]  %s1, 896, %s19, [#allocation5], 128, 128, 8
    $region5: #{tpu_custom_call.1} parent=1 // pred_fallthru
      _
    // Predicated region
    $region6: #{tpu_custom_call.1} parent=1 // pred_check
      _
    $region7: #{tpu_custom_call.1} parent=1 // pred_check_branch
      %26 = sbr.rel (0) target = $region9
    $region8: #{tpu_custom_call.1} parent=1 // pred_region
      %27 = dma.done [#allocation5], 896
    $region9: #{tpu_custom_call.1} parent=1 // pred_fallthru
      _
    %v28 = vld [vmem:[#allocation4] sm:$0xff]
    %v29 = vld [vmem:[#allocation4 + $0x8] sm:$0xff]
    %v30 = vld [vmem:[#allocation4 + $0x10] sm:$0xff]
    %v31 = vld [vmem:[#allocation4 + $0x18] sm:$0xff]
    %v32 = vld [vmem:[#allocation4 + $0x20] sm:$0xff]
    %v33 = vld [vmem:[#allocation4 + $0x28] sm:$0xff]
    %v34 = vld [vmem:[#allocation4 + $0x30] sm:$0xff]
    %v35 = vlaneseq
    %v36 = vshrl.u32 %v35, 7
    %v37 = vadd.s32 %v36, 8
    %v38 = vlaneseq
    %v39 = vand.u32 %v38, 127
    %vm40 = vcmp.eq.s32.totalorder %v36, 0
    %vm41 = vcmp.eq.s32.totalorder %v37, 0
    %s42 = sld [smem:[#allocation3]]
    %v43 = vstv %s42
    %v44 = vsel %vm40, %v43, 4294967295
    %v45 = vsel %vm41, %v43, 4294967295
    %vm46 = vcmp.eq.s32.totalorder %v36, 1
    %vm47 = vcmp.eq.s32.totalorder %v37, 1
    %s48 = sld [smem:[#allocation3 + $0x2]]
    %v49 = vstv %s48
    %v50 = vsel %vm46, %v49, %v44
    %v51 = vsel %vm47, %v49, %v45
    %vm52 = vcmp.eq.s32.totalorder %v36, 2
    %vm53 = vcmp.eq.s32.totalorder %v37, 2
    %s54 = sld [smem:[#allocation3 + $0x4]]
    %v55 = vstv %s54
    %v56 = vsel %vm52, %v55, %v50
    %v57 = vsel %vm53, %v55, %v51
    %vm58 = vcmp.eq.s32.totalorder %v36, 8
    %vm59 = vcmp.eq.s32.totalorder %v37, 8
    %s60 = sld [smem:[#allocation3 + $0x1]]
    %v61 = vstv %s60
    %v62 = vsel %vm58, %v61, %v56
    %v63 = vsel %vm59, %v61, %v57
    %vm64 = vcmp.eq.s32.totalorder %v36, 9
    %vm65 = vcmp.eq.s32.totalorder %v37, 9
    %s66 = sld [smem:[#allocation3 + $0x3]]
    %v67 = vstv %s66
    %v68 = vsel %vm64, %v67, %v62
    %v69 = vsel %vm65, %v67, %v63
    %vm70 = vcmp.eq.s32.totalorder %v36, 10
    %vm71 = vcmp.eq.s32.totalorder %v37, 10
    %s72 = sld [smem:[#allocation3 + $0x5]]
    %v73 = vstv %s72
    %v74 = vsel %vm70, %v73, %v68
    %v75 = vsel %vm71, %v73, %v69
    %vm76 = vcmp.eq.s32.totalorder %v39, %v74
    %vm77 = vcmp.eq.s32.totalorder %v39, %v75
    %v78 = vsel %vm76, 1, 0
    %v79 = vsel %vm77, 1, 0
    %v80 = vcvt.s32.f32 %v78
    %v81 = vcvt.s32.f32 %v79
    %vm82 = vcmask 64512
    %v84 = vsel %vm82, %v80, 0
    %v87 = vsel %vm82, %v81, 0
    %89 = vmatprep.subr.mxu0 0.0
    %90 = vmatpush1.msra.mxu0 0.0
    %91 = vmatprep.subr.mxu0 0.0
    %92 = vmatpush1.msra.mxu0 0.0
    %93 = vmatprep.subr.mxu0 0.0
    %94 = vmatpush1.msra.mxu0 0.0
    %95 = vmatprep.subr.mxu0 0.0
    %96 = vmatpush1.msra.mxu0 0.0
    %97 = vmatprep.subr.mxu0 0.0
    %98 = vmatpush1.msra.mxu0 0.0
    %99 = vmatprep.subr.mxu0 0.0
    %100 = vmatpush1.msra.mxu0 0.0
    %101 = vmatprep.subr.mxu0 0.0
    %102 = vmatpush1.msra.mxu0 0.0
    %103 = vmatprep.subr.mxu0 0.0
    %104 = vmatpush1.msra.mxu0 0.0
    %105 = vmatprep.subr.mxu0 0.0
    %106 = vmatpush1.msra.mxu0 0.0
    %107 = vmatprep.subr.mxu0 0.0
    %108 = vmatpush1.msra.mxu0 0.0
    %109 = vmatprep.subr.mxu0 0.0
    %110 = vmatpush1.msra.mxu0 0.0
    %111 = vmatprep.subr.mxu0 0.0
    %112 = vmatpush1.msra.mxu0 0.0
    %113 = vmatprep.subr.mxu0 0.0
    %114 = vmatpush1.msra.mxu0 0.0
    %115 = vmatprep.subr.mxu0 0.0
    %116 = vmatpush1.msra.mxu0 0.0
    %117 = vmatprep.subr.mxu0 0.0
    %118 = vmatpush1.msra.mxu0 0.0
    %119 = vmatprep.subr.mxu0 0.0
    %120 = vmatpush1.msra.mxu0 %v28
    %121 = vmatprep.subr.mxu0 0.0
    %122 = vmatpush2.msra.mxu0 0.0
    %123 = vmatprep.subr.mxu0 0.0
    %124 = vmatpush2.msra.mxu0 0.0
    %125 = vmatprep.subr.mxu0 0.0
    %126 = vmatpush2.msra.mxu0 0.0
    %127 = vmatprep.subr.mxu0 0.0
    %128 = vmatpush2.msra.mxu0 0.0
    %129 = vmatprep.subr.mxu0 0.0
    %130 = vmatpush2.msra.mxu0 0.0
    %131 = vmatprep.subr.mxu0 0.0
    %132 = vmatpush2.msra.mxu0 0.0
    %133 = vmatprep.subr.mxu0 0.0
    %134 = vmatpush2.msra.mxu0 0.0
    %135 = vmatprep.subr.mxu0 0.0
    %136 = vmatpush2.msra.mxu0 0.0
    %137 = vmatprep.subr.mxu0 0.0
    %138 = vmatpush2.msra.mxu0 0.0
    %139 = vmatprep.subr.mxu0 0.0
    %140 = vmatpush2.msra.mxu0 0.0
    %141 = vmatprep.subr.mxu0 0.0
    %142 = vmatpush2.msra.mxu0 0.0
    %143 = vmatprep.subr.mxu0 0.0
    %144 = vmatpush2.msra.mxu0 0.0
    %145 = vmatprep.subr.mxu0 0.0
    %146 = vmatpush2.msra.mxu0 0.0
    %147 = vmatprep.subr.mxu0 0.0
    %148 = vmatpush2.msra.mxu0 0.0
    %149 = vmatprep.subr.mxu0 0.0
    %150 = vmatpush2.msra.mxu0 0.0
    %151 = vmatprep.subr.mxu0 0.0
    %152 = vmatpush2.msra.mxu0 0.0
    %153 = vmatprep.mubr.f32.mxu0 0.0
    %154 = vmatmul.mubr.f32.gmra.mxu0 %v84
    %v155 = vpop.f32.mrf.mxu0
    %v156 = vadd.f32 0.0, %v155
    %v157 = vpop.f32.mrf.mxu0
    %158 = vmatprep.mubr.f32.mxu0 0.0
    %159 = vmatmul.mubr.f32.gmra.mxu0 %v87
    %v160 = vpop.f32.mrf.mxu0
    %v161 = vadd.f32 0.0, %v160
    %v162 = vpop.f32.mrf.mxu0
    %163 = vdwg.mxu0
    %v164 = vadd.f32 %v156, %v29
    %v165 = vxor.u32 %v164, 2147483648
    %v166 = vmul.f32 %v165, 1.442695
    %v167 = vpow.pop %v166
    %v168 = vadd.f32 %v167, 1.0
    %v169 = vrcp.pop %v168
    %v170 = vmul.f32 1.0, %v169
    %v171 = vtanh.pop %v164
    %v172 = vmul.f32 %v170, 0.0
    %174 = vrot.lane.b32.xlu0 %v171, 122
    %v175 = vpop.permute.xlu0 %174
    %v177 = vmul.f32 %v170, %v175
    %179 = vrot.lane.b32.xlu0 %v177, 2
    %v180 = vpop.permute.xlu0 %179
    %v182 = vadd.f32 %v172, %v180
    %v183 = vtanh.pop %v182
    %185 = vrot.lane.b32.xlu0 %v183, 2
    %v186 = vpop.permute.xlu0 %185
    %v188 = vmul.f32 %v170, %v186
    %v189 = vadd.f32 %v161, %v29
    %191 = vset.pattern.permute.xlu0 4
    %192 = vperm.xlu0 %191, %v188
    %v193 = vpop.permute.xlu0 %192
    %v195 = vmul.f32 %v193, %v30
    %v196 = vadd.f32 %v189, %v195
    %197 = vset.pattern.permute.xlu0 5
    %198 = vperm.xlu0 %197, %v188
    %v199 = vpop.permute.xlu0 %198
    %v201 = vmul.f32 %v199, %v31
    %v202 = vadd.f32 %v196, %v201
    %v203 = vxor.u32 %v202, 2147483648
    %v204 = vmul.f32 %v203, 1.442695
    %v205 = vpow.pop %v204
    %v206 = vadd.f32 %v205, 1.0
    %v207 = vrcp.pop %v206
    %v208 = vmul.f32 1.0, %v207
    %v209 = vtanh.pop %v202
    %v210 = vmul.f32 %v208, %v182
    %212 = vrot.lane.b32.xlu0 %v209, 122
    %v213 = vpop.permute.xlu0 %212
    %v215 = vmul.f32 %v208, %v213
    %217 = vrot.lane.b32.xlu0 %v215, 2
    %v218 = vpop.permute.xlu0 %217
    %v220 = vadd.f32 %v210, %v218
    %v221 = vtanh.pop %v220
    %223 = vrot.lane.b32.xlu0 %v221, 2
    %v224 = vpop.permute.xlu0 %223
    %v226 = vmul.f32 %v208, %v224
    %228 = vset.pattern.permute.xlu0 4
    %229 = vperm.xlu0 %228, %v226
    %v230 = vpop.permute.xlu0 %229
    %v232 = vmul.f32 %v230, %v32
    %v233 = vadd.f32 %v34, %v232
    %234 = vset.pattern.permute.xlu0 5
    %235 = vperm.xlu0 %234, %v226
    %v236 = vpop.permute.xlu0 %235
    %v238 = vmul.f32 %v236, %v33
    %v239 = vadd.f32 %v233, %v238
    %240 = vst [vmem:[#allocation7] sm:$0xff] %v239
    // Predicated region
    $region10: #{tpu_custom_call.1} parent=1 // pred_check
      _
    $region11: #{tpu_custom_call.1} parent=1 // pred_check_branch
      %242 = sbr.rel (0) target = $region13
    $region12: #{tpu_custom_call.1} parent=1 // pred_region
      %s244 = ssub.s32 128, 128
      %245 = vsyncadd [#allocation6], %s244
      %s247 = sshll.u32 [#allocation7], 4
      %s248 = int_to_ptr.vmem [resolvable:$true] %s247
      %250 = dma.vmem_to_hbm [thread:$0]  %s248, 128, %s2, [#allocation6]
    $region13: #{tpu_custom_call.1} parent=1 // pred_fallthru
      _
    // Predicated region
    $region14: #{tpu_custom_call.1} parent=1 // pred_check
      _
    $region15: #{tpu_custom_call.1} parent=1 // pred_check_branch
      %252 = sbr.rel (0) target = $region17
    $region16: #{tpu_custom_call.1} parent=1 // pred_region
      %253 = dma.done [#allocation6], 128
    $region17: #{tpu_custom_call.1} parent=1 // pred_fallthru
      _
    %254 = vsyncpa [#allocation5], 1
    %255 = vsyncpa [#allocation6], 1

</llo_original>
